<compile_context>
chip_gen: v7x
topology: tpu7x:2x2x1
jax: 0.10.0
libtpu: 0.0.40
codegen_flags: <defaults>
</compile_context>

<pallas_src>
import functools

import jax
import jax.numpy as jnp
import numpy as np
from jax.experimental import pallas as pl
from jax.experimental.pallas import tpu as pltpu

_EPS = 1e-7


# ----------------------------------------------------------------------------
# Loss formulas shared by the Pallas kernel and the pure-JAX reference.
# ----------------------------------------------------------------------------
def _atan_pos(x):
    """arctan for x >= 0 via Abramowitz & Stegun 4.4.49 (|err| < 1e-5)."""
    # TODO(synk): jnp.arctan lowering inside Mosaic is version-dependent; a
    # polynomial approximation is used so the kernel always compiles.
    t = (x - 1.0) / (x + 1.0)                       # t in [-1, 1] for x >= 0
    t2 = t * t
    poly = t * (0.9998660 + t2 * (-0.3302995 + t2 * (0.1801410 +
                t2 * (-0.0851330 + t2 * 0.0208351))))
    return 0.25 * float(np.pi) + poly


def _ciou_loss(px1, py1, px2, py2, gx1, gy1, gx2, gy2):
    """Complete-IoU loss (1 - CIoU) per box pair; inputs broadcastable xyxy."""
    iw = jnp.maximum(jnp.minimum(px2, gx2) - jnp.maximum(px1, gx1), 0.0)
    ih = jnp.maximum(jnp.minimum(py2, gy2) - jnp.maximum(py1, gy1), 0.0)
    inter = iw * ih
    area_p = (px2 - px1) * (py2 - py1)
    area_g = (gx2 - gx1) * (gy2 - gy1)
    union = area_p + area_g - inter
    iou = inter / (union + _EPS)

    pcx, pcy = 0.5 * (px1 + px2), 0.5 * (py1 + py2)
    gcx, gcy = 0.5 * (gx1 + gx2), 0.5 * (gy1 + gy2)
    rho2 = (pcx - gcx) ** 2 + (pcy - gcy) ** 2
    cw = jnp.maximum(px2, gx2) - jnp.minimum(px1, gx1)
    ch = jnp.maximum(py2, gy2) - jnp.minimum(py1, gy1)
    c2 = cw * cw + ch * ch + _EPS

    pw = jnp.maximum(px2 - px1, _EPS)
    ph = jnp.maximum(py2 - py1, _EPS)
    gw = jnp.maximum(gx2 - gx1, _EPS)
    gh = jnp.maximum(gy2 - gy1, _EPS)
    v = (4.0 / (float(np.pi) ** 2)) * (_atan_pos(gw / gh) - _atan_pos(pw / ph)) ** 2
    alpha = v / (1.0 - iou + v + _EPS)
    return 1.0 - (iou - rho2 / c2 - alpha * v)


def _from_cxcyhw_to_xyxy(boxes):
    cx, cy, h, w = boxes[..., 0], boxes[..., 1], boxes[..., 2], boxes[..., 3]
    return jnp.stack([cx - 0.5 * w, cy - 0.5 * h, cx + 0.5 * w, cy + 0.5 * h],
                     axis=-1)


# ----------------------------------------------------------------------------
# Pallas kernel (single invocation; everything already resident in VMEM)
# ----------------------------------------------------------------------------
def _set_criterion_kernel(x0_ref, x1_ref,                 # (B, Q)  class-0 / class-1 logits
                          selx0_ref, selx1_ref, mask_ref, # (B, M)  matched logits / lab==0 mask
                          p_ref, g_ref,                   # (4, B*M) matched boxes (lane-dense)
                          out_ref,                        # (3,)    SMEM output
                          *, num_batch, num_queries, num_matches):
    # ---- class loss: sum(lse - x1) over all queries + matched-label correction ----
    x0 = x0_ref[...]
    x1 = x1_ref[...]
    m = jnp.maximum(x0, x1)
    lse = m + jnp.log(jnp.exp(x0 - m) + jnp.exp(x1 - m))       # (B, Q)
    base = jnp.sum(lse - x1)
    corr = jnp.sum(mask_ref[...] * (selx1_ref[...] - selx0_ref[...]))
    out_ref[0] = (base + corr) * (1.0 / (num_batch * num_queries))

    # ---- bbox / ciou losses over all B*M matches at once (matches on lanes) ----
    cx, cy = p_ref[0:1, :], p_ref[1:2, :]
    h, w = p_ref[2:3, :], p_ref[3:4, :]
    px1, py1 = cx - 0.5 * w, cy - 0.5 * h
    px2, py2 = cx + 0.5 * w, cy + 0.5 * h
    gx1, gy1 = g_ref[0:1, :], g_ref[1:2, :]
    gx2, gy2 = g_ref[2:3, :], g_ref[3:4, :]

    l1 = (jnp.abs(px1 - gx1) + jnp.abs(py1 - gy1) +
          jnp.abs(px2 - gx2) + jnp.abs(py2 - gy2))              # (1, B*M)
    out_ref[1] = jnp.sum(l1) * (1.0 / (num_batch * num_matches * 4))

    ciou = _ciou_loss(px1, py1, px2, py2, gx1, gy1, gx2, gy2)   # (1, B*M)
    out_ref[2] = jnp.sum(ciou) * (1.0 / (num_batch * num_matches))


# ----------------------------------------------------------------------------
# Wrapper
# ----------------------------------------------------------------------------
def set_criterion_forward(pred_class, pred_boxes, tgt_labels, tgt_boxes,
                          pred_idx, gt_idx):
    """Pallas implementation of SetCriterion.forward -> {'class','bbox','ciou'}.

    pred_class: (B, Q, 2) f32 logits
    pred_boxes: (B, Q, 4) f32, (cx, cy, h, w)
    tgt_labels: (B, G) int32 in {0, 1}
    tgt_boxes : (B, G, 4) f32, (x1, y1, x2, y2)
    pred_idx  : (B, M) int32  matched prediction indices (matcher output)
    gt_idx    : (B, M) int32  matched target indices     (matcher output)
    """
    B, Q, _ = pred_class.shape
    M = pred_idx.shape[1]          # M > 0 assumed (bbox/ciou always contribute)

    pc = pred_class.astype(jnp.float32)
    x0 = pc[:, :, 0]                                            # (B, Q)
    x1 = pc[:, :, 1]                                            # (B, Q)

    # Tiny XLA gathers of the matched rows (moved out of the kernel per review).
    gather = jax.vmap(lambda a, i: jnp.take(a, i, axis=0))
    pidx = pred_idx.astype(jnp.int32)
    gidx = gt_idx.astype(jnp.int32)
    sel_logits = gather(pc, pidx)                               # (B, M, 2)
    sel_x0 = sel_logits[..., 0]                                 # (B, M)
    sel_x1 = sel_logits[..., 1]                                 # (B, M)
    lab = gather(tgt_labels.astype(jnp.int32), gidx)            # (B, M)
    mask0 = (lab == 0).astype(jnp.float32)                      # (B, M)

    p_sel = gather(pred_boxes.astype(jnp.float32), pidx)        # (B, M, 4) cxcyhw
    g_sel = gather(tgt_boxes.astype(jnp.float32), gidx)         # (B, M, 4) xyxy
    p_t = p_sel.reshape(B * M, 4).T                             # (4, B*M) lane-dense
    g_t = g_sel.reshape(B * M, 4).T                             # (4, B*M)

    kernel = functools.partial(_set_criterion_kernel, num_batch=B,
                               num_queries=Q, num_matches=M)
    vmem = pl.BlockSpec(memory_space=pltpu.MemorySpace.VMEM)
    out = pl.pallas_call(
        kernel,
        out_shape=jax.ShapeDtypeStruct((3,), jnp.float32),
        in_specs=[vmem] * 7,
        out_specs=pl.BlockSpec(memory_space=pltpu.MemorySpace.SMEM),
    )(x0, x1, sel_x0, sel_x1, mask0, p_t, g_t)
    return {"class": out[0], "bbox": out[1], "ciou": out[2]}


# ----------------------------------------------------------------------------
# Pure-JAX reference mirroring the torch forward (for verification)
# ----------------------------------------------------------------------------
def _reference_jax(pred_class, pred_boxes, tgt_labels, tgt_boxes, pred_idx, gt_idx):
    B, Q, _ = pred_class.shape
    cls_l, box_l, ciou_l = [], [], []
    for b in range(B):
        logits = pred_class[b]
        pidx = np.asarray(pred_idx[b])
        gidx = np.asarray(gt_idx[b])
        gt_class = tgt_labels[b][gidx]
        gt_b = tgt_boxes[b][gidx]
        sel_boxes = _from_cxcyhw_to_xyxy(pred_boxes[b])[pidx]
        # _get_class_loss: [selected; remaining] reorder, dummy class 1, CE / Q
        selected = logits[pidx]
        mask = np.ones(Q, bool)
        mask[pidx] = False
        remaining = logits[np.where(mask)[0]]
        ordered = jnp.concatenate([selected, remaining], axis=0)
        full_cls = jnp.concatenate(
            [gt_class, jnp.ones((Q - pidx.shape[0],), jnp.int32)], axis=0)
        oh = jax.nn.one_hot(full_cls, 2, dtype=jnp.float32)
        cls_l.append(-jnp.sum(oh * jax.nn.log_softmax(ordered, axis=-1)) / Q)
        if pidx.shape[0] > 0:
            box_l.append(jnp.mean(jnp.abs(sel_boxes - gt_b)))
            cols_p = tuple(sel_boxes[:, i:i + 1] for i in range(4))
            cols_g = tuple(gt_b[:, i:i + 1] for i in range(4))
            ciou_l.append(jnp.mean(_ciou_loss(*cols_p, *cols_g)))
    return {"class": jnp.stack(cls_l).mean(),
            "bbox": jnp.stack(box_l).mean(),
            "ciou": jnp.stack(ciou_l).mean()}


if __name__ == "__main__":
    key = jax.random.PRNGKey(0)
    B, Q, M, G = 2, 16, 4, 4          # batch, queries, matched pairs, gt objects
    ks = jax.random.split(key, 8)

    pred_class = jax.random.normal(ks[0], (B, Q, 2), jnp.float32)
    cxcy = jax.random.uniform(ks[1], (B, Q, 2), jnp.float32, 0.2, 0.8)
    hw = jax.random.uniform(ks[2], (B, Q, 2), jnp.float32, 0.1, 0.6)
    pred_boxes = jnp.concatenate([cxcy, hw], axis=-1)            # (cx, cy, h, w)

    tgt_labels = jax.random.randint(ks[3], (B, G), 0, 2).astype(jnp.int32)
    xy1 = jax.random.uniform(ks[4], (B, G, 2), jnp.float32, 0.0, 0.4)
    wh = jax.random.uniform(ks[5], (B, G, 2), jnp.float32, 0.1, 0.5)
    tgt_boxes = jnp.concatenate([xy1, xy1 + wh], axis=-1)        # xyxy

    # matcher output (precomputed; see TODO at top): unique indices per image
    pred_idx = jnp.stack(
        [jax.random.permutation(jax.random.fold_in(ks[6], b), Q)[:M]
         for b in range(B)]).astype(jnp.int32)
    gt_idx = jnp.stack(
        [jax.random.permutation(jax.random.fold_in(ks[7], b), G)[:M]
         for b in range(B)]).astype(jnp.int32)

    losses = set_criterion_forward(pred_class, pred_boxes, tgt_labels, tgt_boxes,
                                   pred_idx, gt_idx)
    jax.block_until_ready(losses)

    ref = _reference_jax(pred_class, pred_boxes, tgt_labels, tgt_boxes,
                         pred_idx, gt_idx)
    for k in ("class", "bbox", "ciou"):
        np.testing.assert_allclose(np.asarray(losses[k]), np.asarray(ref[k]),
                                   rtol=1e-4, atol=1e-5)

    print("KERNEL_OK")
</pallas_src>

<mosaic_0001>
module attributes {stable_mosaic.version = 11 : i64} {
  func.func @_set_criterion_kernel(%arg0: memref<2x16xf32, #tpu.memory_space<vmem>>, %arg1: memref<2x16xf32, #tpu.memory_space<vmem>>, %arg2: memref<2x4xf32, #tpu.memory_space<vmem>>, %arg3: memref<2x4xf32, #tpu.memory_space<vmem>>, %arg4: memref<2x4xf32, #tpu.memory_space<vmem>>, %arg5: memref<4x8xf32, #tpu.memory_space<vmem>>, %arg6: memref<4x8xf32, #tpu.memory_space<vmem>>, %arg7: memref<3xf32, #tpu.memory_space<smem>>) attributes {dimension_semantics = [], scalar_prefetch = 0 : i64, scratch_operands = 0 : i64, tpu.core_type = #tpu.core_type<tc>} {
    %c0 = arith.constant 0 : index
    %c0_0 = arith.constant 0 : index
    %0 = vector.load %arg0[%c0, %c0_0] : memref<2x16xf32, #tpu.memory_space<vmem>>, vector<2x16xf32>
    %c0_1 = arith.constant 0 : index
    %c0_2 = arith.constant 0 : index
    %1 = vector.load %arg1[%c0_1, %c0_2] : memref<2x16xf32, #tpu.memory_space<vmem>>, vector<2x16xf32>
    %2 = arith.maximumf %0, %1 : vector<2x16xf32>
    %3 = arith.subf %0, %2 : vector<2x16xf32>
    %4 = math.exp %3 : vector<2x16xf32>
    %5 = arith.subf %1, %2 : vector<2x16xf32>
    %6 = math.exp %5 : vector<2x16xf32>
    %7 = arith.addf %4, %6 : vector<2x16xf32>
    %8 = math.log %7 : vector<2x16xf32>
    %9 = arith.addf %2, %8 : vector<2x16xf32>
    %10 = arith.subf %9, %1 : vector<2x16xf32>
    %11 = vector.shape_cast %10 : vector<2x16xf32> to vector<1x2x16xf32>
    %cst = arith.constant dense<0.000000e+00> : vector<1xf32>
    %12 = vector.multi_reduction <add>, %11, %cst [1, 2] : vector<1x2x16xf32> to vector<1xf32>
    %13 = vector.shape_cast %12 : vector<1xf32> to vector<1x1x1xf32>
    %14 = vector.extract %13[0, 0, 0] : f32 from vector<1x1x1xf32>
    %c0_3 = arith.constant 0 : index
    %c0_4 = arith.constant 0 : index
    %15 = vector.load %arg4[%c0_3, %c0_4] : memref<2x4xf32, #tpu.memory_space<vmem>>, vector<2x4xf32>
    %c0_5 = arith.constant 0 : index
    %c0_6 = arith.constant 0 : index
    %16 = vector.load %arg3[%c0_5, %c0_6] : memref<2x4xf32, #tpu.memory_space<vmem>>, vector<2x4xf32>
    %c0_7 = arith.constant 0 : index
    %c0_8 = arith.constant 0 : index
    %17 = vector.load %arg2[%c0_7, %c0_8] : memref<2x4xf32, #tpu.memory_space<vmem>>, vector<2x4xf32>
    %18 = arith.subf %16, %17 : vector<2x4xf32>
    %19 = arith.mulf %15, %18 : vector<2x4xf32>
    %20 = vector.shape_cast %19 : vector<2x4xf32> to vector<1x2x4xf32>
    %cst_9 = arith.constant dense<0.000000e+00> : vector<1xf32>
    %21 = vector.multi_reduction <add>, %20, %cst_9 [1, 2] : vector<1x2x4xf32> to vector<1xf32>
    %22 = vector.shape_cast %21 : vector<1xf32> to vector<1x1x1xf32>
    %23 = vector.extract %22[0, 0, 0] : f32 from vector<1x1x1xf32>
    %24 = arith.addf %14, %23 : f32
    %cst_10 = arith.constant 3.125000e-02 : f32
    %25 = arith.mulf %24, %cst_10 : f32
    %c0_11 = arith.constant 0 : index
    %26 = memref.load %arg7[%c0_11] : memref<3xf32, #tpu.memory_space<smem>>
    memref.store %25, %arg7[%c0_11] : memref<3xf32, #tpu.memory_space<smem>>
    %c0_12 = arith.constant 0 : index
    %c0_13 = arith.constant 0 : index
    %27 = vector.load %arg5[%c0_12, %c0_13] : memref<4x8xf32, #tpu.memory_space<vmem>>, vector<1x8xf32>
    %c1 = arith.constant 1 : index
    %c0_14 = arith.constant 0 : index
    %28 = vector.load %arg5[%c1, %c0_14] : memref<4x8xf32, #tpu.memory_space<vmem>>, vector<1x8xf32>
    %c2 = arith.constant 2 : index
    %c0_15 = arith.constant 0 : index
    %29 = vector.load %arg5[%c2, %c0_15] : memref<4x8xf32, #tpu.memory_space<vmem>>, vector<1x8xf32>
    %c3 = arith.constant 3 : index
    %c0_16 = arith.constant 0 : index
    %30 = vector.load %arg5[%c3, %c0_16] : memref<4x8xf32, #tpu.memory_space<vmem>>, vector<1x8xf32>
    %cst_17 = arith.constant 5.000000e-01 : f32
    %31 = vector.broadcast %cst_17 : f32 to vector<1x8xf32>
    %32 = arith.mulf %31, %30 : vector<1x8xf32>
    %33 = arith.subf %27, %32 : vector<1x8xf32>
    %cst_18 = arith.constant 5.000000e-01 : f32
    %34 = vector.broadcast %cst_18 : f32 to vector<1x8xf32>
    %35 = arith.mulf %34, %29 : vector<1x8xf32>
    %36 = arith.subf %28, %35 : vector<1x8xf32>
    %cst_19 = arith.constant 5.000000e-01 : f32
    %37 = vector.broadcast %cst_19 : f32 to vector<1x8xf32>
    %38 = arith.mulf %37, %30 : vector<1x8xf32>
    %39 = arith.addf %27, %38 : vector<1x8xf32>
    %cst_20 = arith.constant 5.000000e-01 : f32
    %40 = vector.broadcast %cst_20 : f32 to vector<1x8xf32>
    %41 = arith.mulf %40, %29 : vector<1x8xf32>
    %42 = arith.addf %28, %41 : vector<1x8xf32>
    %c0_21 = arith.constant 0 : index
    %c0_22 = arith.constant 0 : index
    %43 = vector.load %arg6[%c0_21, %c0_22] : memref<4x8xf32, #tpu.memory_space<vmem>>, vector<1x8xf32>
    %c1_23 = arith.constant 1 : index
    %c0_24 = arith.constant 0 : index
    %44 = vector.load %arg6[%c1_23, %c0_24] : memref<4x8xf32, #tpu.memory_space<vmem>>, vector<1x8xf32>
    %c2_25 = arith.constant 2 : index
    %c0_26 = arith.constant 0 : index
    %45 = vector.load %arg6[%c2_25, %c0_26] : memref<4x8xf32, #tpu.memory_space<vmem>>, vector<1x8xf32>
    %c3_27 = arith.constant 3 : index
    %c0_28 = arith.constant 0 : index
    %46 = vector.load %arg6[%c3_27, %c0_28] : memref<4x8xf32, #tpu.memory_space<vmem>>, vector<1x8xf32>
    %47 = arith.subf %33, %43 : vector<1x8xf32>
    %48 = math.absf %47 : vector<1x8xf32>
    %49 = arith.subf %36, %44 : vector<1x8xf32>
    %50 = math.absf %49 : vector<1x8xf32>
    %51 = arith.addf %48, %50 : vector<1x8xf32>
    %52 = arith.subf %39, %45 : vector<1x8xf32>
    %53 = math.absf %52 : vector<1x8xf32>
    %54 = arith.addf %51, %53 : vector<1x8xf32>
    %55 = arith.subf %42, %46 : vector<1x8xf32>
    %56 = math.absf %55 : vector<1x8xf32>
    %57 = arith.addf %54, %56 : vector<1x8xf32>
    %58 = vector.shape_cast %57 : vector<1x8xf32> to vector<1x1x8xf32>
    %cst_29 = arith.constant dense<0.000000e+00> : vector<1xf32>
    %59 = vector.multi_reduction <add>, %58, %cst_29 [1, 2] : vector<1x1x8xf32> to vector<1xf32>
    %60 = vector.shape_cast %59 : vector<1xf32> to vector<1x1x1xf32>
    %61 = vector.extract %60[0, 0, 0] : f32 from vector<1x1x1xf32>
    %cst_30 = arith.constant 3.125000e-02 : f32
    %62 = arith.mulf %61, %cst_30 : f32
    %c1_31 = arith.constant 1 : index
    %63 = memref.load %arg7[%c1_31] : memref<3xf32, #tpu.memory_space<smem>>
    memref.store %62, %arg7[%c1_31] : memref<3xf32, #tpu.memory_space<smem>>
    %64 = arith.minimumf %39, %45 : vector<1x8xf32>
    %65 = arith.maximumf %33, %43 : vector<1x8xf32>
    %66 = arith.subf %64, %65 : vector<1x8xf32>
    %cst_32 = arith.constant 0.000000e+00 : f32
    %67 = vector.broadcast %cst_32 : f32 to vector<1x8xf32>
    %68 = arith.maximumf %66, %67 : vector<1x8xf32>
    %69 = arith.minimumf %42, %46 : vector<1x8xf32>
    %70 = arith.maximumf %36, %44 : vector<1x8xf32>
    %71 = arith.subf %69, %70 : vector<1x8xf32>
    %cst_33 = arith.constant 0.000000e+00 : f32
    %72 = vector.broadcast %cst_33 : f32 to vector<1x8xf32>
    %73 = arith.maximumf %71, %72 : vector<1x8xf32>
    %74 = arith.mulf %68, %73 : vector<1x8xf32>
    %75 = arith.subf %39, %33 : vector<1x8xf32>
    %76 = arith.subf %42, %36 : vector<1x8xf32>
    %77 = arith.mulf %75, %76 : vector<1x8xf32>
    %78 = arith.subf %45, %43 : vector<1x8xf32>
    %79 = arith.subf %46, %44 : vector<1x8xf32>
    %80 = arith.mulf %78, %79 : vector<1x8xf32>
    %81 = arith.addf %77, %80 : vector<1x8xf32>
    %82 = arith.subf %81, %74 : vector<1x8xf32>
    %cst_34 = arith.constant 1.000000e-07 : f32
    %83 = vector.broadcast %cst_34 : f32 to vector<1x8xf32>
    %84 = arith.addf %82, %83 : vector<1x8xf32>
    %85 = arith.divf %74, %84 : vector<1x8xf32>
    %86 = arith.addf %33, %39 : vector<1x8xf32>
    %cst_35 = arith.constant 5.000000e-01 : f32
    %87 = vector.broadcast %cst_35 : f32 to vector<1x8xf32>
    %88 = arith.mulf %87, %86 : vector<1x8xf32>
    %89 = arith.addf %36, %42 : vector<1x8xf32>
    %cst_36 = arith.constant 5.000000e-01 : f32
    %90 = vector.broadcast %cst_36 : f32 to vector<1x8xf32>
    %91 = arith.mulf %90, %89 : vector<1x8xf32>
    %92 = arith.addf %43, %45 : vector<1x8xf32>
    %cst_37 = arith.constant 5.000000e-01 : f32
    %93 = vector.broadcast %cst_37 : f32 to vector<1x8xf32>
    %94 = arith.mulf %93, %92 : vector<1x8xf32>
    %95 = arith.addf %44, %46 : vector<1x8xf32>
    %cst_38 = arith.constant 5.000000e-01 : f32
    %96 = vector.broadcast %cst_38 : f32 to vector<1x8xf32>
    %97 = arith.mulf %96, %95 : vector<1x8xf32>
    %98 = arith.subf %88, %94 : vector<1x8xf32>
    %99 = arith.mulf %98, %98 : vector<1x8xf32>
    %100 = arith.subf %91, %97 : vector<1x8xf32>
    %101 = arith.mulf %100, %100 : vector<1x8xf32>
    %102 = arith.addf %99, %101 : vector<1x8xf32>
    %103 = arith.maximumf %39, %45 : vector<1x8xf32>
    %104 = arith.minimumf %33, %43 : vector<1x8xf32>
    %105 = arith.subf %103, %104 : vector<1x8xf32>
    %106 = arith.maximumf %42, %46 : vector<1x8xf32>
    %107 = arith.minimumf %36, %44 : vector<1x8xf32>
    %108 = arith.subf %106, %107 : vector<1x8xf32>
    %109 = arith.mulf %105, %105 : vector<1x8xf32>
    %110 = arith.mulf %108, %108 : vector<1x8xf32>
    %111 = arith.addf %109, %110 : vector<1x8xf32>
    %cst_39 = arith.constant 1.000000e-07 : f32
    %112 = vector.broadcast %cst_39 : f32 to vector<1x8xf32>
    %113 = arith.addf %111, %112 : vector<1x8xf32>
    %114 = arith.subf %39, %33 : vector<1x8xf32>
    %cst_40 = arith.constant 1.000000e-07 : f32
    %115 = vector.broadcast %cst_40 : f32 to vector<1x8xf32>
    %116 = arith.maximumf %114, %115 : vector<1x8xf32>
    %117 = arith.subf %42, %36 : vector<1x8xf32>
    %cst_41 = arith.constant 1.000000e-07 : f32
    %118 = vector.broadcast %cst_41 : f32 to vector<1x8xf32>
    %119 = arith.maximumf %117, %118 : vector<1x8xf32>
    %120 = arith.subf %45, %43 : vector<1x8xf32>
    %cst_42 = arith.constant 1.000000e-07 : f32
    %121 = vector.broadcast %cst_42 : f32 to vector<1x8xf32>
    %122 = arith.maximumf %120, %121 : vector<1x8xf32>
    %123 = arith.subf %46, %44 : vector<1x8xf32>
    %cst_43 = arith.constant 1.000000e-07 : f32
    %124 = vector.broadcast %cst_43 : f32 to vector<1x8xf32>
    %125 = arith.maximumf %123, %124 : vector<1x8xf32>
    %126 = arith.divf %122, %125 : vector<1x8xf32>
    %cst_44 = arith.constant 1.000000e+00 : f32
    %127 = vector.broadcast %cst_44 : f32 to vector<1x8xf32>
    %128 = arith.subf %126, %127 : vector<1x8xf32>
    %cst_45 = arith.constant 1.000000e+00 : f32
    %129 = vector.broadcast %cst_45 : f32 to vector<1x8xf32>
    %130 = arith.addf %126, %129 : vector<1x8xf32>
    %131 = arith.divf %128, %130 : vector<1x8xf32>
    %132 = arith.mulf %131, %131 : vector<1x8xf32>
    %cst_46 = arith.constant 2.083510e-02 : f32
    %133 = vector.broadcast %cst_46 : f32 to vector<1x8xf32>
    %134 = arith.mulf %132, %133 : vector<1x8xf32>
    %cst_47 = arith.constant -8.513300e-02 : f32
    %135 = vector.broadcast %cst_47 : f32 to vector<1x8xf32>
    %136 = arith.addf %135, %134 : vector<1x8xf32>
    %137 = arith.mulf %132, %136 : vector<1x8xf32>
    %cst_48 = arith.constant 1.801410e-01 : f32
    %138 = vector.broadcast %cst_48 : f32 to vector<1x8xf32>
    %139 = arith.addf %138, %137 : vector<1x8xf32>
    %140 = arith.mulf %132, %139 : vector<1x8xf32>
    %cst_49 = arith.constant -0.330299497 : f32
    %141 = vector.broadcast %cst_49 : f32 to vector<1x8xf32>
    %142 = arith.addf %141, %140 : vector<1x8xf32>
    %143 = arith.mulf %132, %142 : vector<1x8xf32>
    %cst_50 = arith.constant 9.998660e-01 : f32
    %144 = vector.broadcast %cst_50 : f32 to vector<1x8xf32>
    %145 = arith.addf %144, %143 : vector<1x8xf32>
    %146 = arith.mulf %131, %145 : vector<1x8xf32>
    %cst_51 = arith.constant 0.785398185 : f32
    %147 = vector.broadcast %cst_51 : f32 to vector<1x8xf32>
    %148 = arith.addf %147, %146 : vector<1x8xf32>
    %149 = arith.divf %116, %119 : vector<1x8xf32>
    %cst_52 = arith.constant 1.000000e+00 : f32
    %150 = vector.broadcast %cst_52 : f32 to vector<1x8xf32>
    %151 = arith.subf %149, %150 : vector<1x8xf32>
    %cst_53 = arith.constant 1.000000e+00 : f32
    %152 = vector.broadcast %cst_53 : f32 to vector<1x8xf32>
    %153 = arith.addf %149, %152 : vector<1x8xf32>
    %154 = arith.divf %151, %153 : vector<1x8xf32>
    %155 = arith.mulf %154, %154 : vector<1x8xf32>
    %cst_54 = arith.constant 2.083510e-02 : f32
    %156 = vector.broadcast %cst_54 : f32 to vector<1x8xf32>
    %157 = arith.mulf %155, %156 : vector<1x8xf32>
    %cst_55 = arith.constant -8.513300e-02 : f32
    %158 = vector.broadcast %cst_55 : f32 to vector<1x8xf32>
    %159 = arith.addf %158, %157 : vector<1x8xf32>
    %160 = arith.mulf %155, %159 : vector<1x8xf32>
    %cst_56 = arith.constant 1.801410e-01 : f32
    %161 = vector.broadcast %cst_56 : f32 to vector<1x8xf32>
    %162 = arith.addf %161, %160 : vector<1x8xf32>
    %163 = arith.mulf %155, %162 : vector<1x8xf32>
    %cst_57 = arith.constant -0.330299497 : f32
    %164 = vector.broadcast %cst_57 : f32 to vector<1x8xf32>
    %165 = arith.addf %164, %163 : vector<1x8xf32>
    %166 = arith.mulf %155, %165 : vector<1x8xf32>
    %cst_58 = arith.constant 9.998660e-01 : f32
    %167 = vector.broadcast %cst_58 : f32 to vector<1x8xf32>
    %168 = arith.addf %167, %166 : vector<1x8xf32>
    %169 = arith.mulf %154, %168 : vector<1x8xf32>
    %cst_59 = arith.constant 0.785398185 : f32
    %170 = vector.broadcast %cst_59 : f32 to vector<1x8xf32>
    %171 = arith.addf %170, %169 : vector<1x8xf32>
    %172 = arith.subf %148, %171 : vector<1x8xf32>
    %173 = arith.mulf %172, %172 : vector<1x8xf32>
    %cst_60 = arith.constant 0.405284733 : f32
    %174 = vector.broadcast %cst_60 : f32 to vector<1x8xf32>
    %175 = arith.mulf %174, %173 : vector<1x8xf32>
    %cst_61 = arith.constant 1.000000e+00 : f32
    %176 = vector.broadcast %cst_61 : f32 to vector<1x8xf32>
    %177 = arith.subf %176, %85 : vector<1x8xf32>
    %178 = arith.addf %177, %175 : vector<1x8xf32>
    %cst_62 = arith.constant 1.000000e-07 : f32
    %179 = vector.broadcast %cst_62 : f32 to vector<1x8xf32>
    %180 = arith.addf %178, %179 : vector<1x8xf32>
    %181 = arith.divf %175, %180 : vector<1x8xf32>
    %182 = arith.divf %102, %113 : vector<1x8xf32>
    %183 = arith.subf %85, %182 : vector<1x8xf32>
    %184 = arith.mulf %181, %175 : vector<1x8xf32>
    %185 = arith.subf %183, %184 : vector<1x8xf32>
    %cst_63 = arith.constant 1.000000e+00 : f32
    %186 = vector.broadcast %cst_63 : f32 to vector<1x8xf32>
    %187 = arith.subf %186, %185 : vector<1x8xf32>
    %188 = vector.shape_cast %187 : vector<1x8xf32> to vector<1x1x8xf32>
    %cst_64 = arith.constant dense<0.000000e+00> : vector<1xf32>
    %189 = vector.multi_reduction <add>, %188, %cst_64 [1, 2] : vector<1x1x8xf32> to vector<1xf32>
    %190 = vector.shape_cast %189 : vector<1xf32> to vector<1x1x1xf32>
    %191 = vector.extract %190[0, 0, 0] : f32 from vector<1x1x1xf32>
    %cst_65 = arith.constant 1.250000e-01 : f32
    %192 = arith.mulf %191, %cst_65 : f32
    %c2_66 = arith.constant 2 : index
    %193 = memref.load %arg7[%c2_66] : memref<3xf32, #tpu.memory_space<smem>>
    memref.store %192, %arg7[%c2_66] : memref<3xf32, #tpu.memory_space<smem>>
    return
  }
}

</mosaic_0001>

<llo_original>
// kernel: tpu_custom_call.1
$region0: #{tpu_custom_call.1}
  #allocation0 [shape = 'u32[]', space=smem, size = 0x4, offset = 0x4, fixed_abs, tag = 'smem constant byte address 0x4 - core index']
  #allocation1 [shape = 'u32[144,128]{1,0:T(1,128)}', space=vmem, size = 0x12000, scoped, tag = 'internal scratch']
  %s0 = inlined_call_operand.hbm [shape: f32[2,16], index: 0, kind: input, shape index: {}]
  %s1 = inlined_call_operand.vmem [shape: f32[2,16], index: 1, kind: input, shape index: {}]
  %s2 = inlined_call_operand.hbm [shape: f32[2,4], index: 2, kind: input, shape index: {}]
  %s3 = inlined_call_operand.hbm [shape: f32[2,4], index: 3, kind: input, shape index: {}]
  %s4 = inlined_call_operand.vmem [shape: f32[2,4], index: 4, kind: input, shape index: {}]
  %s5 = inlined_call_operand.vmem [shape: f32[4,8], index: 5, kind: input, shape index: {}]
  %s6 = inlined_call_operand.vmem [shape: f32[4,8], index: 6, kind: input, shape index: {}]
  %s7 = inlined_call_operand.hbm [shape: f32[3], index: 7, kind: output, shape index: {}]
  %s8 = sld [smem:[#allocation0]]
  $region50: #{tpu_custom_call.1} parent=0
    _
  %s10 = ssub.s32 1, %s8
  %s11 = scalar_select 0, %s10, %s8
  $region1: #{tpu_custom_call.1} parent=0
    #allocation2 [shape = 'u8[1024]{0}', space=vmem, size = 0x400, scoped, tag = 'input window, operand 0, single buffered']
    #allocation3 [shape = 's32[1]{0}', space=sflag, size = 0x4, scoped, tag = 'scoped memory for tpu_custom_call.1']
    #allocation4 [shape = 's32[1]{0}', space=sflag, size = 0x4, scoped, tag = 'scoped memory for tpu_custom_call.1']
    #allocation5 [shape = 'u8[1024]{0}', space=vmem, size = 0x400, scoped, tag = 'input window, operand 2, single buffered']
    #allocation6 [shape = 's32[1]{0}', space=sflag, size = 0x4, scoped, tag = 'scoped memory for tpu_custom_call.1']
    #allocation7 [shape = 'u8[1024]{0}', space=vmem, size = 0x400, scoped, tag = 'input window, operand 3, single buffered']
    #allocation8 [shape = 'u8[512]{0}', space=smem, size = 0x200, scoped, tag = 'output window, operand 0, single buffered']
    %12 = vsyncpa [#allocation3], 0
    %13 = vsyncpa [#allocation6], 0
    %14 = vsyncpa [#allocation4], 0
    // Predicated region
    $region2: #{tpu_custom_call.1} parent=1 // pred_check
      _
    $region3: #{tpu_custom_call.1} parent=1 // pred_check_branch
      %16 = sbr.rel (0) target = $region5
    $region4: #{tpu_custom_call.1} parent=1 // pred_region
      %s18 = ssub.s32 32, 32
      %19 = vsyncadd [#allocation3], %s18
      %s21 = sshll.u32 [#allocation2], 4
      %s22 = int_to_ptr.vmem [resolvable:$true] %s21
      %24 = dma.hbm_to_vmem [thread:$0]  %s0, 32, %s22, [#allocation3]
    $region5: #{tpu_custom_call.1} parent=1 // pred_fallthru
      _
    // Predicated region
    $region6: #{tpu_custom_call.1} parent=1 // pred_check
      _
    $region7: #{tpu_custom_call.1} parent=1 // pred_check_branch
      %26 = sbr.rel (0) target = $region9
    $region8: #{tpu_custom_call.1} parent=1 // pred_region
      _
    $region9: #{tpu_custom_call.1} parent=1 // pred_fallthru
      _
    // Predicated region
    $region10: #{tpu_custom_call.1} parent=1 // pred_check
      _
    $region11: #{tpu_custom_call.1} parent=1 // pred_check_branch
      %28 = sbr.rel (0) target = $region13
    $region12: #{tpu_custom_call.1} parent=1 // pred_region
      %s30 = ssub.s32 32, 32
      %31 = vsyncadd [#allocation6], %s30
      %s33 = sshll.u32 [#allocation5], 4
      %s34 = int_to_ptr.vmem [resolvable:$true] %s33
      %36 = dma.hbm_to_vmem [thread:$0]  %s2, 32, %s34, [#allocation6]
    $region13: #{tpu_custom_call.1} parent=1 // pred_fallthru
      _
    // Predicated region
    $region14: #{tpu_custom_call.1} parent=1 // pred_check
      _
    $region15: #{tpu_custom_call.1} parent=1 // pred_check_branch
      %38 = sbr.rel (0) target = $region17
    $region16: #{tpu_custom_call.1} parent=1 // pred_region
      %s40 = ssub.s32 32, 32
      %41 = vsyncadd [#allocation6], %s40
      %s43 = sshll.u32 [#allocation7], 4
      %s44 = int_to_ptr.vmem [resolvable:$true] %s43
      %46 = dma.hbm_to_vmem [thread:$0]  %s3, 32, %s44, [#allocation6]
    $region17: #{tpu_custom_call.1} parent=1 // pred_fallthru
      _
    // Predicated region
    $region18: #{tpu_custom_call.1} parent=1 // pred_check
      _
    $region19: #{tpu_custom_call.1} parent=1 // pred_check_branch
      %48 = sbr.rel (0) target = $region21
    $region20: #{tpu_custom_call.1} parent=1 // pred_region
      _
    $region21: #{tpu_custom_call.1} parent=1 // pred_fallthru
      _
    // Predicated region
    $region22: #{tpu_custom_call.1} parent=1 // pred_check
      _
    $region23: #{tpu_custom_call.1} parent=1 // pred_check_branch
      %50 = sbr.rel (0) target = $region25
    $region24: #{tpu_custom_call.1} parent=1 // pred_region
      _
    $region25: #{tpu_custom_call.1} parent=1 // pred_fallthru
      _
    // Predicated region
    $region26: #{tpu_custom_call.1} parent=1 // pred_check
      _
    $region27: #{tpu_custom_call.1} parent=1 // pred_check_branch
      %52 = sbr.rel (0) target = $region29
    $region28: #{tpu_custom_call.1} parent=1 // pred_region
      _
    $region29: #{tpu_custom_call.1} parent=1 // pred_fallthru
      _
    // Predicated region
    $region30: #{tpu_custom_call.1} parent=1 // pred_check
      _
    $region31: #{tpu_custom_call.1} parent=1 // pred_check_branch
      %54 = sbr.rel (0) target = $region33
    $region32: #{tpu_custom_call.1} parent=1 // pred_region
      %55 = dma.done [#allocation3], 32
    $region33: #{tpu_custom_call.1} parent=1 // pred_fallthru
      _
    // Predicated region
    $region34: #{tpu_custom_call.1} parent=1 // pred_check
      _
    $region35: #{tpu_custom_call.1} parent=1 // pred_check_branch
      %57 = sbr.rel (0) target = $region37
    $region36: #{tpu_custom_call.1} parent=1 // pred_region
      %58 = dma.done [#allocation6], 32
    $region37: #{tpu_custom_call.1} parent=1 // pred_fallthru
      _
    // Predicated region
    $region38: #{tpu_custom_call.1} parent=1 // pred_check
      _
    $region39: #{tpu_custom_call.1} parent=1 // pred_check_branch
      %60 = sbr.rel (0) target = $region41
    $region40: #{tpu_custom_call.1} parent=1 // pred_region
      %61 = dma.done [#allocation6], 32
    $region41: #{tpu_custom_call.1} parent=1 // pred_fallthru
      _
    %v62 = vld [vmem:[#allocation2] sm:$0x3]
    %v63 = vld [vmem:[%s1] sm:$0x3]
    %v64 = vmax.f32 %v62, %v63
    %v65 = vsub.f32 %v62, %v64
    %v66 = vmul.f32 %v65, 1.442695
    %v67 = vpow.pop %v66
    %v68 = vsub.f32 %v63, %v64
    %v69 = vmul.f32 %v68, 1.442695
    %v70 = vpow.pop %v69
    %v71 = vadd.f32 %v67, %v70
    %v72 = vlog2.pop %v71
    %v73 = vmul.f32 %v72, 0.6931472
    %v74 = vadd.f32 %v64, %v73
    %v75 = vsub.f32 %v74, %v63
    %vm76 = vcmask 123904
    %v77 = vsel %vm76, %v75, 0.0
    %78 = vadd.xlane.f32.xlu0 %v77
    %v79 = vpop.xlane.xlu0 %78
    %v80 = vrot.slane %v79, 4
    %v81 = vadd.f32 %v79, %v80
    %v82 = vrot.slane %v81, 2
    %v83 = vadd.f32 %v81, %v82
    %v84 = vrot.slane %v83, 1
    %v85 = vadd.f32 %v83, %v84
    %s86 = vtos %v85
    %v87 = vld [vmem:[%s4] sm:$0x3]
    %v88 = vld [vmem:[#allocation7] sm:$0x3]
    %v89 = vld [vmem:[#allocation5] sm:$0x3]
    %v90 = vsub.f32 %v88, %v89
    %v91 = vmul.f32 %v87, %v90
    %vm92 = vcmask 25600
    %v93 = vsel %vm92, %v91, 0.0
    %94 = vadd.xlane.f32.xlu0 %v93
    %v95 = vpop.xlane.xlu0 %94
    %v96 = vrot.slane %v95, 4
    %v97 = vadd.f32 %v95, %v96
    %v98 = vrot.slane %v97, 2
    %v99 = vadd.f32 %v97, %v98
    %v100 = vrot.slane %v99, 1
    %v101 = vadd.f32 %v99, %v100
    %s102 = vtos %v101
    %s103 = sadd.f32 %s86, %s102
    %s104 = smul.f32 %s103, 0.03125
    %s105 = scalar_lea.smem [#allocation8], 0
    %106 = sst [smem:[%s105]] %s104
    %v107 = vld [vmem:[%s5] sm:$0x1]
    %v108 = vld [vmem:[%s5 + $0x1] sm:$0x1]
    %v109 = vld [vmem:[%s5 + $0x2] sm:$0x1]
    %v110 = vld [vmem:[%s5 + $0x3] sm:$0x1]
    %v111 = vmul.f32 %v110, 0.5
    %v112 = vsub.f32 %v107, %v111
    %v113 = vmul.f32 %v109, 0.5
    %v114 = vsub.f32 %v108, %v113
    %v115 = vadd.f32 %v107, %v111
    %v116 = vadd.f32 %v108, %v113
    %v117 = vld [vmem:[%s6] sm:$0x1]
    %v118 = vld [vmem:[%s6 + $0x1] sm:$0x1]
    %v119 = vld [vmem:[%s6 + $0x2] sm:$0x1]
    %v120 = vld [vmem:[%s6 + $0x3] sm:$0x1]
    %v121 = vsub.f32 %v112, %v117
    %v122 = vand.u32 2147483647, %v121
    %v123 = vsub.f32 %v114, %v118
    %v124 = vand.u32 2147483647, %v123
    %v125 = vadd.f32 %v122, %v124
    %v126 = vsub.f32 %v115, %v119
    %v127 = vand.u32 2147483647, %v126
    %v128 = vadd.f32 %v125, %v127
    %v129 = vsub.f32 %v116, %v120
    %v130 = vand.u32 2147483647, %v129
    %v131 = vadd.f32 %v128, %v130
    %vm132 = vcmask 57344
    %v133 = vsel %vm132, %v131, 0.0
    %134 = vadd.xlane.f32.xlu0 %v133
    %v135 = vpop.xlane.xlu0 %134
    %v136 = vrot.slane %v135, 4
    %v137 = vadd.f32 %v135, %v136
    %v138 = vrot.slane %v137, 2
    %v139 = vadd.f32 %v137, %v138
    %v140 = vrot.slane %v139, 1
    %v141 = vadd.f32 %v139, %v140
    %s142 = vtos %v141
    %s143 = smul.f32 %s142, 0.03125
    %s144 = scalar_lea.smem [#allocation8], 1
    %145 = sst [smem:[%s144]] %s143
    %v146 = vmin.f32 %v115, %v119
    %v147 = vmax.f32 %v112, %v117
    %v148 = vsub.f32 %v146, %v147
    %v149 = vmax.f32 %v148, 0.0
    %v150 = vmin.f32 %v116, %v120
    %v151 = vmax.f32 %v114, %v118
    %v152 = vsub.f32 %v150, %v151
    %v153 = vmax.f32 %v152, 0.0
    %v154 = vmul.f32 %v149, %v153
    %v155 = vsub.f32 %v115, %v112
    %v156 = vsub.f32 %v116, %v114
    %v157 = vmul.f32 %v155, %v156
    %v158 = vsub.f32 %v119, %v117
    %v159 = vsub.f32 %v120, %v118
    %v160 = vmul.f32 %v158, %v159
    %v161 = vadd.f32 %v157, %v160
    %v162 = vsub.f32 %v161, %v154
    %v163 = vadd.f32 %v162, 1e-07
    %v164 = vrcp.pop %v163
    %v165 = vmul.f32 %v154, %v164
    %v166 = vadd.f32 %v112, %v115
    %v167 = vmul.f32 %v166, 0.5
    %v168 = vadd.f32 %v114, %v116
    %v169 = vmul.f32 %v168, 0.5
    %v170 = vadd.f32 %v117, %v119
    %v171 = vmul.f32 %v170, 0.5
    %v172 = vadd.f32 %v118, %v120
    %v173 = vmul.f32 %v172, 0.5
    %v174 = vsub.f32 %v167, %v171
    %v175 = vmul.f32 %v174, %v174
    %v176 = vsub.f32 %v169, %v173
    %v177 = vmul.f32 %v176, %v176
    %v178 = vadd.f32 %v175, %v177
    %v179 = vmax.f32 %v115, %v119
    %v180 = vmin.f32 %v112, %v117
    %v181 = vsub.f32 %v179, %v180
    %v182 = vmax.f32 %v116, %v120
    %v183 = vmin.f32 %v114, %v118
    %v184 = vsub.f32 %v182, %v183
    %v185 = vmul.f32 %v181, %v181
    %v186 = vmul.f32 %v184, %v184
    %v187 = vadd.f32 %v185, %v186
    %v188 = vadd.f32 %v187, 1e-07
    %v189 = vmax.f32 %v155, 1e-07
    %v190 = vmax.f32 %v156, 1e-07
    %v191 = vmax.f32 %v158, 1e-07
    %v192 = vmax.f32 %v159, 1e-07
    %v193 = vrcp.pop %v192
    %v194 = vmul.f32 %v191, %v193
    %v195 = vsub.f32 %v194, 1.0
    %v196 = vadd.f32 %v194, 1.0
    %v197 = vrcp.pop %v196
    %v198 = vmul.f32 %v195, %v197
    %v199 = vmul.f32 %v198, %v198
    %v200 = vmul.f32 %v199, 0.0208351
    %v201 = vadd.f32 %v200, -0.085133
    %v202 = vmul.f32 %v199, %v201
    %v203 = vadd.f32 %v202, 0.180141
    %v204 = vmul.f32 %v199, %v203
    %v205 = vadd.f32 %v204, -0.3302995
    %v206 = vmul.f32 %v199, %v205
    %v207 = vadd.f32 %v206, 0.999866
    %v208 = vmul.f32 %v198, %v207
    %v209 = vadd.f32 %v208, 0.7853982
    %v210 = vrcp.pop %v190
    %v211 = vmul.f32 %v189, %v210
    %v212 = vsub.f32 %v211, 1.0
    %v213 = vadd.f32 %v211, 1.0
    %v214 = vrcp.pop %v213
    %v215 = vmul.f32 %v212, %v214
    %v216 = vmul.f32 %v215, %v215
    %v217 = vmul.f32 %v216, 0.0208351
    %v218 = vadd.f32 %v217, -0.085133
    %v219 = vmul.f32 %v216, %v218
    %v220 = vadd.f32 %v219, 0.180141
    %v221 = vmul.f32 %v216, %v220
    %v222 = vadd.f32 %v221, -0.3302995
    %v223 = vmul.f32 %v216, %v222
    %v224 = vadd.f32 %v223, 0.999866
    %v225 = vmul.f32 %v215, %v224
    %v226 = vadd.f32 %v225, 0.7853982
    %v227 = vsub.f32 %v209, %v226
    %v228 = vmul.f32 %v227, %v227
    %v229 = vmul.f32 %v228, 0.40528473
    %v230 = vsub.f32 1.0, %v165
    %v231 = vadd.f32 %v230, %v229
    %v232 = vadd.f32 %v231, 1e-07
    %v233 = vrcp.pop %v232
    %v234 = vmul.f32 %v229, %v233
    %v235 = vrcp.pop %v188
    %v236 = vmul.f32 %v178, %v235
    %v237 = vsub.f32 %v165, %v236
    %v238 = vmul.f32 %v234, %v229
    %v239 = vsub.f32 %v237, %v238
    %v240 = vsub.f32 1.0, %v239
    %v241 = vsel %vm132, %v240, 0.0
    %242 = vadd.xlane.f32.xlu0 %v241
    %v243 = vpop.xlane.xlu0 %242
    %v244 = vrot.slane %v243, 4
    %v245 = vadd.f32 %v243, %v244
    %v246 = vrot.slane %v245, 2
    %v247 = vadd.f32 %v245, %v246
    %v248 = vrot.slane %v247, 1
    %v249 = vadd.f32 %v247, %v248
    %s250 = vtos %v249
    %s251 = smul.f32 %s250, 0.125
    %s252 = scalar_lea.smem [#allocation8], 2
    %253 = sst [smem:[%s252]] %s251
    // Predicated region
    $region42: #{tpu_custom_call.1} parent=1 // pred_check
      _
    $region43: #{tpu_custom_call.1} parent=1 // pred_check_branch
      %255 = sbr.rel (0) target = $region45
    $region44: #{tpu_custom_call.1} parent=1 // pred_region
      %s257 = ssub.s32 16, 16
      %258 = vsyncadd [#allocation4], %s257
      %261 = dma.smem_to_hbm [#allocation8], 16, %s7, [#allocation4]
    $region45: #{tpu_custom_call.1} parent=1 // pred_fallthru
      _
    // Predicated region
    $region46: #{tpu_custom_call.1} parent=1 // pred_check
      _
    $region47: #{tpu_custom_call.1} parent=1 // pred_check_branch
      %263 = sbr.rel (0) target = $region49
    $region48: #{tpu_custom_call.1} parent=1 // pred_region
      %264 = dma.done [#allocation4], 16
    $region49: #{tpu_custom_call.1} parent=1 // pred_fallthru
      _
    %265 = sfence
    %266 = vsyncpa [#allocation3], 1
    %267 = vsyncpa [#allocation6], 1
    %268 = vsyncpa [#allocation4], 1

</llo_original>
